<compile_context>
chip_gen: v7x
topology: tpu7x:2x2x1
jax: 0.10.0
libtpu: 0.0.40
codegen_flags: <defaults>
</compile_context>

<pallas_src>
import jax
import jax.numpy as jnp
from jax.experimental import pallas as pl
from jax.experimental.pallas import tpu as pltpu


# ------------------------------- kernel body --------------------------------

def _critic_kernel(x_ref, w1_ref, w2_ref, w3b_ref, b_ref, out_ref):
    """Both Q-heads fused on the lane axis.

    x_ref   : [tb, S+A]         batch tile (state || action)
    w1_ref  : [S+A, 2H]         layer-1 weights, heads stacked on lanes
    w2_ref  : [2H, 2H]          layer-2 weights, block-diagonal (head-independent)
    w3b_ref : [2H + 8, 2]       rows 0:2H = layer-3 weights (col h = head h),
                                row 2H   = layer-3 biases (b3_q1, b3_q2)
    b_ref   : [2, 2H]           row 0 = b1 (both heads), row 1 = b2 (both heads)
    out_ref : [tb, 2]           column h = Q_{h+1}
    """
    F = b_ref.shape[1]  # fused hidden width = 2 * hidden

    x = x_ref[...]
    h1 = jnp.dot(x, w1_ref[...], preferred_element_type=jnp.float32) + b_ref[0:1, :]
    h1 = jnp.maximum(h1, 0.0)
    h2 = jnp.dot(h1, w2_ref[...], preferred_element_type=jnp.float32) + b_ref[1:2, :]
    h2 = jnp.maximum(h2, 0.0)
    out_ref[...] = (
        jnp.dot(h2, w3b_ref[:F, :], preferred_element_type=jnp.float32)
        + w3b_ref[F:F + 1, :]
    )


# ------------------------------- host wrapper --------------------------------

def critic_pallas(state, action, params, *, batch_tile=None):
    """Fused forward of both Q-nets.  Returns (batch, 2): column h = Q_{h+1}."""
    x = jnp.concatenate([state, action], axis=-1).astype(jnp.float32)
    batch, in_dim = x.shape
    F = params["w2"].shape[0]          # fused hidden width (2 * hidden)
    rows3 = params["w3b"].shape[0]     # F + 8 (bias row + pad)

    if batch_tile is None:
        # One tile for small batches (v5e/v6e: single TensorCore, grid steps are
        # pure overhead).  For large training batches split into two "parallel"
        # tiles so both v7x TensorCores get work.
        batch_tile = batch if batch < 512 else -(-batch // 2)
    tb = min(batch, batch_tile)
    if tb != batch:
        tb = ((tb + 7) // 8) * 8       # sublane-aligned tile
    grid = (pl.cdiv(batch, tb),)

    def resident(shape):
        # Full-array block, same block every grid step -> weights stay in VMEM.
        return pl.BlockSpec(shape, lambda i: (0,) * len(shape))

    return pl.pallas_call(
        _critic_kernel,
        out_shape=jax.ShapeDtypeStruct((batch, 2), jnp.float32),
        grid_spec=pltpu.PrefetchScalarGridSpec(
            num_scalar_prefetch=0,
            grid=grid,
            in_specs=[
                pl.BlockSpec((tb, in_dim), lambda i: (i, 0)),   # x (batch-tiled)
                resident((in_dim, F)),                          # w1  (fused)
                resident((F, F)),                               # w2  (block-diag)
                resident((rows3, 2)),                           # w3 + b3
                resident((2, F)),                               # b1 / b2
            ],
            out_specs=pl.BlockSpec((tb, 2), lambda i: (i, 0)),
        ),
        compiler_params=pltpu.CompilerParams(
            dimension_semantics=("parallel",),   # batch tiles independent
        ),
    )(x, params["w1"], params["w2"], params["w3b"], params["b12"])


@jax.jit
def critic_forward(state, action, params):
    q = critic_pallas(state, action, params)
    q1, q2 = jnp.split(q, 2, axis=-1)
    return q1, q2


# ----------------------------- parameter init --------------------------------

def _linear_init(key, fan_in, fan_out):
    """torch.nn.Linear-style uniform(-1/sqrt(fan_in), 1/sqrt(fan_in)) init."""
    kw, kb = jax.random.split(key)
    bound = 1.0 / (fan_in ** 0.5)
    w = jax.random.uniform(kw, (fan_in, fan_out), jnp.float32, -bound, bound)
    b = jax.random.uniform(kb, (fan_out,), jnp.float32, -bound, bound)
    return w, b


def init_critic_params(key, state_dim, action_dim, hidden=64):
    """Two independent MLPs (in -> 64 -> 64 -> 1), head-fused on the lane axis."""
    in_dim = state_dim + action_dim
    F = 2 * hidden  # fused lane width (128 for hidden=64)

    w1p = jnp.zeros((in_dim, F), jnp.float32)
    w2bd = jnp.zeros((F, F), jnp.float32)
    w3b = jnp.zeros((F + 8, 2), jnp.float32)   # rows 0:F = w3, row F = b3
    bpack = jnp.zeros((2, F), jnp.float32)     # row 0 = b1, row 1 = b2

    for h in range(2):
        key, k1, k2, k3 = jax.random.split(key, 4)
        w1, b1 = _linear_init(k1, in_dim, hidden)
        w2, b2 = _linear_init(k2, hidden, hidden)
        w3, b3 = _linear_init(k3, hidden, 1)
        lo, hi = h * hidden, (h + 1) * hidden
        w1p = w1p.at[:, lo:hi].set(w1)
        w2bd = w2bd.at[lo:hi, lo:hi].set(w2)
        bpack = bpack.at[0, lo:hi].set(b1)
        bpack = bpack.at[1, lo:hi].set(b2)
        w3b = w3b.at[lo:hi, h].set(w3[:, 0])
        w3b = w3b.at[F, h].set(b3[0])

    # TODO(synk): could additionally store weights in bf16 (MXU-native on
    # v6e/v7x) to halve weight DMA bytes; kept f32 to preserve exact semantics.
    params = {"w1": w1p, "w2": w2bd, "w3b": w3b, "b12": bpack}
    return params, key


# ------------------------------ pure-JAX reference ---------------------------

def critic_ref(state, action, p):
    x = jnp.concatenate([state, action], axis=-1)
    F = p["b12"].shape[1]
    hidden = F // 2
    hp = jax.lax.Precision.HIGHEST
    outs = []
    for h in range(2):
        lo, hi = h * hidden, (h + 1) * hidden
        h1 = jnp.maximum(
            jnp.dot(x, p["w1"][:, lo:hi], precision=hp) + p["b12"][0, lo:hi], 0.0)
        h2 = jnp.maximum(
            jnp.dot(h1, p["w2"][lo:hi, lo:hi], precision=hp) + p["b12"][1, lo:hi], 0.0)
        q = jnp.dot(h2, p["w3b"][lo:hi, h:h + 1], precision=hp) + p["w3b"][F, h]
        outs.append(q)
    return outs[0], outs[1]


# ------------------------------------ main ------------------------------------

if __name__ == "__main__":
    key = jax.random.PRNGKey(0)
    batch, state_dim, action_dim = 8, 16, 4

    key, ks, ka = jax.random.split(key, 3)
    state = jax.random.normal(ks, (batch, state_dim), jnp.float32)
    action = jax.random.normal(ka, (batch, action_dim), jnp.float32)

    params, key = init_critic_params(key, state_dim, action_dim)

    q1, q2 = critic_forward(state, action, params)
    jax.block_until_ready((q1, q2))

    q1_ref, q2_ref = critic_ref(state, action, params)
    assert q1.shape == (batch, 1) and q2.shape == (batch, 1)
    assert jnp.allclose(q1, q1_ref, atol=1e-4, rtol=1e-4)
    assert jnp.allclose(q2, q2_ref, atol=1e-4, rtol=1e-4)

    print("KERNEL_OK")
</pallas_src>

<mosaic_0001>
module attributes {stable_mosaic.version = 11 : i64} {
  func.func @_critic_kernel(%arg0: i32, %arg1: memref<8x20xf32, #tpu.memory_space<vmem>>, %arg2: memref<20x128xf32, #tpu.memory_space<vmem>>, %arg3: memref<128x128xf32, #tpu.memory_space<vmem>>, %arg4: memref<136x2xf32, #tpu.memory_space<vmem>>, %arg5: memref<2x128xf32, #tpu.memory_space<vmem>>, %arg6: memref<8x2xf32, #tpu.memory_space<vmem>>) attributes {dimension_semantics = [#tpu.dimension_semantics<parallel>], iteration_bounds = array<i64: 1>, scalar_prefetch = 0 : i64, scratch_operands = 0 : i64, tpu.core_type = #tpu.core_type<tc>, window_params = [{transform_indices = @transform_0, window_bounds = array<i64: 8, 20>}, {pipeline_mode = #tpu.pipeline_mode<synchronous>, transform_indices = @transform_1, window_bounds = array<i64: 20, 128>}, {pipeline_mode = #tpu.pipeline_mode<synchronous>, transform_indices = @transform_2, window_bounds = array<i64: 128, 128>}, {pipeline_mode = #tpu.pipeline_mode<synchronous>, transform_indices = @transform_3, window_bounds = array<i64: 136, 2>}, {pipeline_mode = #tpu.pipeline_mode<synchronous>, transform_indices = @transform_4, window_bounds = array<i64: 2, 128>}, {transform_indices = @transform_5, window_bounds = array<i64: 8, 2>}]} {
    %c0 = arith.constant 0 : index
    %c0_0 = arith.constant 0 : index
    %0 = vector.load %arg1[%c0, %c0_0] : memref<8x20xf32, #tpu.memory_space<vmem>>, vector<8x20xf32>
    %c0_1 = arith.constant 0 : index
    %c0_2 = arith.constant 0 : index
    %1 = vector.load %arg2[%c0_1, %c0_2] : memref<20x128xf32, #tpu.memory_space<vmem>>, vector<20x128xf32>
    %cst = arith.constant dense<0.000000e+00> : vector<8x128xf32>
    %2 = tpu.matmul %0, %1, %cst {dimension_numbers = #tpu.dot_dimension_numbers<[1], [0], [0], [1], [0, 0, 1, 1], [], []>} : vector<8x20xf32>, vector<20x128xf32>, vector<8x128xf32> -> vector<8x128xf32>
    %c0_3 = arith.constant 0 : index
    %c0_4 = arith.constant 0 : index
    %3 = vector.load %arg5[%c0_3, %c0_4] : memref<2x128xf32, #tpu.memory_space<vmem>>, vector<1x128xf32>
    %4 = vector.broadcast %3 : vector<1x128xf32> to vector<8x128xf32>
    %5 = arith.addf %2, %4 : vector<8x128xf32>
    %cst_5 = arith.constant 0.000000e+00 : f32
    %6 = vector.broadcast %cst_5 : f32 to vector<8x128xf32>
    %7 = arith.maximumf %5, %6 : vector<8x128xf32>
    %c0_6 = arith.constant 0 : index
    %c0_7 = arith.constant 0 : index
    %8 = vector.load %arg3[%c0_6, %c0_7] : memref<128x128xf32, #tpu.memory_space<vmem>>, vector<128x128xf32>
    %cst_8 = arith.constant dense<0.000000e+00> : vector<8x128xf32>
    %9 = tpu.matmul %7, %8, %cst_8 {dimension_numbers = #tpu.dot_dimension_numbers<[1], [0], [0], [1], [0, 0, 1, 1], [], []>} : vector<8x128xf32>, vector<128x128xf32>, vector<8x128xf32> -> vector<8x128xf32>
    %c1 = arith.constant 1 : index
    %c0_9 = arith.constant 0 : index
    %10 = vector.load %arg5[%c1, %c0_9] : memref<2x128xf32, #tpu.memory_space<vmem>>, vector<1x128xf32>
    %11 = vector.broadcast %10 : vector<1x128xf32> to vector<8x128xf32>
    %12 = arith.addf %9, %11 : vector<8x128xf32>
    %cst_10 = arith.constant 0.000000e+00 : f32
    %13 = vector.broadcast %cst_10 : f32 to vector<8x128xf32>
    %14 = arith.maximumf %12, %13 : vector<8x128xf32>
    %c0_11 = arith.constant 0 : index
    %c0_12 = arith.constant 0 : index
    %15 = vector.load %arg4[%c0_11, %c0_12] : memref<136x2xf32, #tpu.memory_space<vmem>>, vector<128x2xf32>
    %cst_13 = arith.constant dense<0.000000e+00> : vector<8x2xf32>
    %16 = tpu.matmul %14, %15, %cst_13 {dimension_numbers = #tpu.dot_dimension_numbers<[1], [0], [0], [1], [0, 0, 1, 1], [], []>} : vector<8x128xf32>, vector<128x2xf32>, vector<8x2xf32> -> vector<8x2xf32>
    %c128 = arith.constant 128 : index
    %c0_14 = arith.constant 0 : index
    %17 = vector.load %arg4[%c128, %c0_14] : memref<136x2xf32, #tpu.memory_space<vmem>>, vector<1x2xf32>
    %18 = vector.broadcast %17 : vector<1x2xf32> to vector<8x2xf32>
    %19 = arith.addf %16, %18 : vector<8x2xf32>
    %c0_15 = arith.constant 0 : index
    %c0_16 = arith.constant 0 : index
    %20 = vector.load %arg6[%c0_15, %c0_16] : memref<8x2xf32, #tpu.memory_space<vmem>>, vector<8x2xf32>
    tpu.vector_store %arg6[%c0_15, %c0_16], %19 {strides = array<i32>} : memref<8x2xf32, #tpu.memory_space<vmem>>, vector<8x2xf32>,
    return
  }
  func.func @transform_0(%arg0: i32) -> (i32, i32) {
    %c0_i32 = arith.constant 0 : i32
    %c0_i32_0 = arith.constant 0 : i32
    return %arg0, %c0_i32 : i32, i32
  }
  func.func @transform_1(%arg0: i32) -> (i32, i32) {
    %c0_i32 = arith.constant 0 : i32
    %c0_i32_0 = arith.constant 0 : i32
    %c0_i32_1 = arith.constant 0 : i32
    return %c0_i32, %c0_i32_0 : i32, i32
  }
  func.func @transform_2(%arg0: i32) -> (i32, i32) {
    %c0_i32 = arith.constant 0 : i32
    %c0_i32_0 = arith.constant 0 : i32
    %c0_i32_1 = arith.constant 0 : i32
    return %c0_i32, %c0_i32_0 : i32, i32
  }
  func.func @transform_3(%arg0: i32) -> (i32, i32) {
    %c0_i32 = arith.constant 0 : i32
    %c0_i32_0 = arith.constant 0 : i32
    %c0_i32_1 = arith.constant 0 : i32
    return %c0_i32, %c0_i32_0 : i32, i32
  }
  func.func @transform_4(%arg0: i32) -> (i32, i32) {
    %c0_i32 = arith.constant 0 : i32
    %c0_i32_0 = arith.constant 0 : i32
    %c0_i32_1 = arith.constant 0 : i32
    return %c0_i32, %c0_i32_0 : i32, i32
  }
  func.func @transform_5(%arg0: i32) -> (i32, i32) {
    %c0_i32 = arith.constant 0 : i32
    %c0_i32_0 = arith.constant 0 : i32
    return %arg0, %c0_i32 : i32, i32
  }
}

</mosaic_0001>

<llo_original>
// kernel: critic_forward.1
$region0: #{critic_forward.1}
  #allocation0 [shape = 'u32[]', space=smem, size = 0x4, offset = 0x4, fixed_abs, tag = 'smem constant byte address 0x4 - core index']
  #allocation1 [shape = 'u32[144,128]{1,0:T(1,128)}', space=vmem, size = 0x12000, scoped, tag = 'internal scratch']
  %s0 = inlined_call_operand.vmem [shape: f32[8,20], index: 0, kind: input, shape index: {}]
  %s1 = inlined_call_operand.vmem [shape: f32[20,128], index: 1, kind: input, shape index: {}]
  %s2 = inlined_call_operand.vmem [shape: f32[128,128], index: 2, kind: input, shape index: {}]
  %s3 = inlined_call_operand.vmem [shape: f32[136,2], index: 3, kind: input, shape index: {}]
  %s4 = inlined_call_operand.vmem [shape: f32[2,128], index: 4, kind: input, shape index: {}]
  %s5 = inlined_call_operand.vmem [shape: f32[8,2], index: 5, kind: output, shape index: {}]
  %s6 = sld [smem:[#allocation0]]
  $region30: #{critic_forward.1} parent=0
    _
  %s8 = ssub.s32 1, %s6
  %s9 = scalar_select 0, %s8, %s6
  // Predicated region
  $region2: #{critic_forward.1} parent=0 // pred_check
    _
  $region3: #{critic_forward.1} parent=0 // pred_check_branch
    %11 = sbr.rel (0) target = $region5
  $region4: #{critic_forward.1} parent=0 // pred_region
    _
  $region5: #{critic_forward.1} parent=0 // pred_fallthru
    _
  // Predicated region
  $region6: #{critic_forward.1} parent=0 // pred_check
    _
  $region7: #{critic_forward.1} parent=0 // pred_check_branch
    %13 = sbr.rel (0) target = $region9
  $region8: #{critic_forward.1} parent=0 // pred_region
    _
  $region9: #{critic_forward.1} parent=0 // pred_fallthru
    _
  // Predicated region
  $region10: #{critic_forward.1} parent=0 // pred_check
    _
  $region11: #{critic_forward.1} parent=0 // pred_check_branch
    %15 = sbr.rel (0) target = $region13
  $region12: #{critic_forward.1} parent=0 // pred_region
    _
  $region13: #{critic_forward.1} parent=0 // pred_fallthru
    _
  // Predicated region
  $region14: #{critic_forward.1} parent=0 // pred_check
    _
  $region15: #{critic_forward.1} parent=0 // pred_check_branch
    %17 = sbr.rel (0) target = $region17
  $region16: #{critic_forward.1} parent=0 // pred_region
    _
  $region17: #{critic_forward.1} parent=0 // pred_fallthru
    _
  // Predicated region
  $region18: #{critic_forward.1} parent=0 // pred_check
    _
  $region19: #{critic_forward.1} parent=0 // pred_check_branch
    %19 = sbr.rel (0) target = $region21
  $region20: #{critic_forward.1} parent=0 // pred_region
    _
  $region21: #{critic_forward.1} parent=0 // pred_fallthru
    _
  %v20 = vld [vmem:[%s0] sm:$0xff]
  %v21 = vld [vmem:[%s1] sm:$0xff]
  %v22 = vld [vmem:[%s1 + $0x8] sm:$0xff]
  %v23 = vld [vmem:[%s1 + $0x10] sm:$0xf]
  %v24 = vld [vmem:[%s4] sm:$0x1]
  %v25 = vlaneseq
  %v26 = vshrl.u32 %v25, 7
  %v27 = vsub.s32 0, %v26
  %v28 = vrot.slane %v24, %v27
  %vm29 = vcmask 162816
  %v31 = vsel %vm29, %v20, 0
  %vm33 = vcmask 1043456
  %v35 = vsel %vm33, %v23, 0
  %37 = vmatprep.subr.mxu0 0.0
  %38 = vmatpush1.msra.mxu0 %v21
  %39 = vmatprep.subr.mxu0 0.0
  %40 = vmatpush1.msra.mxu0 %v22
  %41 = vmatprep.subr.mxu0 0.0
  %42 = vmatpush1.msra.mxu0 %v35
  %43 = vmatprep.subr.mxu0 0.0
  %44 = vmatpush1.msra.mxu0 0.0
  %45 = vmatprep.subr.mxu0 0.0
  %46 = vmatpush1.msra.mxu0 0.0
  %47 = vmatprep.subr.mxu0 0.0
  %48 = vmatpush1.msra.mxu0 0.0
  %49 = vmatprep.subr.mxu0 0.0
  %50 = vmatpush1.msra.mxu0 0.0
  %51 = vmatprep.subr.mxu0 0.0
  %52 = vmatpush1.msra.mxu0 0.0
  %53 = vmatprep.subr.mxu0 0.0
  %54 = vmatpush1.msra.mxu0 0.0
  %55 = vmatprep.subr.mxu0 0.0
  %56 = vmatpush1.msra.mxu0 0.0
  %57 = vmatprep.subr.mxu0 0.0
  %58 = vmatpush1.msra.mxu0 0.0
  %59 = vmatprep.subr.mxu0 0.0
  %60 = vmatpush1.msra.mxu0 0.0
  %61 = vmatprep.subr.mxu0 0.0
  %62 = vmatpush1.msra.mxu0 0.0
  %63 = vmatprep.subr.mxu0 0.0
  %64 = vmatpush1.msra.mxu0 0.0
  %65 = vmatprep.subr.mxu0 0.0
  %66 = vmatpush1.msra.mxu0 0.0
  %67 = vmatprep.subr.mxu0 0.0
  %68 = vmatpush1.msra.mxu0 0.0
  %69 = vmatprep.subr.mxu0 0.0
  %70 = vmatpush1.msra.mxu0 0.0
  %71 = vmatprep.subr.mxu0 0.0
  %72 = vmatpush1.msra.mxu0 0.0
  %73 = vmatprep.subr.mxu0 0.0
  %74 = vmatpush1.msra.mxu0 0.0
  %75 = vmatprep.subr.mxu0 0.0
  %76 = vmatpush1.msra.mxu0 0.0
  %77 = vmatprep.subr.mxu0 0.0
  %78 = vmatpush1.msra.mxu0 0.0
  %79 = vmatprep.subr.mxu0 0.0
  %80 = vmatpush1.msra.mxu0 0.0
  %81 = vmatprep.subr.mxu0 0.0
  %82 = vmatpush1.msra.mxu0 0.0
  %83 = vmatprep.subr.mxu0 0.0
  %84 = vmatpush1.msra.mxu0 0.0
  %85 = vmatprep.subr.mxu0 0.0
  %86 = vmatpush1.msra.mxu0 0.0
  %87 = vmatprep.subr.mxu0 0.0
  %88 = vmatpush1.msra.mxu0 0.0
  %89 = vmatprep.subr.mxu0 0.0
  %90 = vmatpush1.msra.mxu0 0.0
  %91 = vmatprep.subr.mxu0 0.0
  %92 = vmatpush1.msra.mxu0 0.0
  %93 = vmatprep.subr.mxu0 0.0
  %94 = vmatpush1.msra.mxu0 0.0
  %95 = vmatprep.subr.mxu0 0.0
  %96 = vmatpush1.msra.mxu0 0.0
  %97 = vmatprep.subr.mxu0 0.0
  %98 = vmatpush1.msra.mxu0 0.0
  %99 = vmatprep.subr.mxu0 0.0
  %100 = vmatpush1.msra.mxu0 0.0
  %101 = vmatprep.mubr.f32.mxu0 0.0
  %102 = vmatmul.mubr.f32.gmra.mrb[0].mxu0 %v31
  %v103 = vpop.f32.mrb[0].mxu0
  %v104 = vadd.f32 %v28, %v103
  %v105 = vpop.f32.mrb[0].mxu0
  %106 = vdwg.mxu0
  %v107 = vmax.f32 %v104, 0.0
  %v108 = vld [vmem:[%s2] sm:$0xff]
  %v109 = vld [vmem:[%s2 + $0x8] sm:$0xff]
  %v110 = vld [vmem:[%s2 + $0x10] sm:$0xff]
  %v111 = vld [vmem:[%s2 + $0x18] sm:$0xff]
  %v112 = vld [vmem:[%s2 + $0x20] sm:$0xff]
  %v113 = vld [vmem:[%s2 + $0x28] sm:$0xff]
  %v114 = vld [vmem:[%s2 + $0x30] sm:$0xff]
  %v115 = vld [vmem:[%s2 + $0x38] sm:$0xff]
  %v116 = vld [vmem:[%s2 + $0x40] sm:$0xff]
  %v117 = vld [vmem:[%s2 + $0x48] sm:$0xff]
  %v118 = vld [vmem:[%s2 + $0x50] sm:$0xff]
  %v119 = vld [vmem:[%s2 + $0x58] sm:$0xff]
  %v120 = vld [vmem:[%s2 + $0x60] sm:$0xff]
  %v121 = vld [vmem:[%s2 + $0x68] sm:$0xff]
  %v122 = vld [vmem:[%s2 + $0x70] sm:$0xff]
  %v123 = vld [vmem:[%s2 + $0x78] sm:$0xff]
  %v124 = vld [vmem:[%s4 + $0x1] sm:$0x1]
  %v125 = vlaneseq
  %v126 = vshrl.u32 %v125, 7
  %v127 = vsub.s32 0, %v126
  %v128 = vrot.slane %v124, %v127
  %129 = vmatprep.subr.mxu0 0.0
  %130 = vmatpush1.msra.mxu0 %v108
  %131 = vmatprep.subr.mxu0 0.0
  %132 = vmatpush1.msra.mxu0 %v109
  %133 = vmatprep.subr.mxu0 0.0
  %134 = vmatpush1.msra.mxu0 %v110
  %135 = vmatprep.subr.mxu0 0.0
  %136 = vmatpush1.msra.mxu0 %v111
  %137 = vmatprep.subr.mxu0 0.0
  %138 = vmatpush1.msra.mxu0 %v112
  %139 = vmatprep.subr.mxu0 0.0
  %140 = vmatpush1.msra.mxu0 %v113
  %141 = vmatprep.subr.mxu0 0.0
  %142 = vmatpush1.msra.mxu0 %v114
  %143 = vmatprep.subr.mxu0 0.0
  %144 = vmatpush1.msra.mxu0 %v115
  %145 = vmatprep.subr.mxu0 0.0
  %146 = vmatpush1.msra.mxu0 %v116
  %147 = vmatprep.subr.mxu0 0.0
  %148 = vmatpush1.msra.mxu0 %v117
  %149 = vmatprep.subr.mxu0 0.0
  %150 = vmatpush1.msra.mxu0 %v118
  %151 = vmatprep.subr.mxu0 0.0
  %152 = vmatpush1.msra.mxu0 %v119
  %153 = vmatprep.subr.mxu0 0.0
  %154 = vmatpush1.msra.mxu0 %v120
  %155 = vmatprep.subr.mxu0 0.0
  %156 = vmatpush1.msra.mxu0 %v121
  %157 = vmatprep.subr.mxu0 0.0
  %158 = vmatpush1.msra.mxu0 %v122
  %159 = vmatprep.subr.mxu0 0.0
  %160 = vmatpush1.msra.mxu0 %v123
  %161 = vmatprep.subr.mxu0 0.0
  %162 = vmatpush1.msra.mxu0 0.0
  %163 = vmatprep.subr.mxu0 0.0
  %164 = vmatpush1.msra.mxu0 0.0
  %165 = vmatprep.subr.mxu0 0.0
  %166 = vmatpush1.msra.mxu0 0.0
  %167 = vmatprep.subr.mxu0 0.0
  %168 = vmatpush1.msra.mxu0 0.0
  %169 = vmatprep.subr.mxu0 0.0
  %170 = vmatpush1.msra.mxu0 0.0
  %171 = vmatprep.subr.mxu0 0.0
  %172 = vmatpush1.msra.mxu0 0.0
  %173 = vmatprep.subr.mxu0 0.0
  %174 = vmatpush1.msra.mxu0 0.0
  %175 = vmatprep.subr.mxu0 0.0
  %176 = vmatpush1.msra.mxu0 0.0
  %177 = vmatprep.subr.mxu0 0.0
  %178 = vmatpush1.msra.mxu0 0.0
  %179 = vmatprep.subr.mxu0 0.0
  %180 = vmatpush1.msra.mxu0 0.0
  %181 = vmatprep.subr.mxu0 0.0
  %182 = vmatpush1.msra.mxu0 0.0
  %183 = vmatprep.subr.mxu0 0.0
  %184 = vmatpush1.msra.mxu0 0.0
  %185 = vmatprep.subr.mxu0 0.0
  %186 = vmatpush1.msra.mxu0 0.0
  %187 = vmatprep.subr.mxu0 0.0
  %188 = vmatpush1.msra.mxu0 0.0
  %189 = vmatprep.subr.mxu0 0.0
  %190 = vmatpush1.msra.mxu0 0.0
  %191 = vmatprep.subr.mxu0 0.0
  %192 = vmatpush1.msra.mxu0 0.0
  %193 = vmatprep.mubr.f32.mxu0 0.0
  %194 = vmatmul.mubr.f32.gmra.mrb[0].mxu0 %v107
  %v195 = vpop.f32.mrb[0].mxu0
  %v196 = vadd.f32 %v128, %v195
  %v197 = vpop.f32.mrb[0].mxu0
  %198 = vdwg.mxu0
  %v199 = vmax.f32 %v196, 0.0
  %v200 = vld [vmem:[%s3] sm:$0xff]
  %v201 = vld [vmem:[%s3 + $0x8] sm:$0xff]
  %v202 = vld [vmem:[%s3 + $0x10] sm:$0xff]
  %v203 = vld [vmem:[%s3 + $0x18] sm:$0xff]
  %v204 = vld [vmem:[%s3 + $0x20] sm:$0xff]
  %v205 = vld [vmem:[%s3 + $0x28] sm:$0xff]
  %v206 = vld [vmem:[%s3 + $0x30] sm:$0xff]
  %v207 = vld [vmem:[%s3 + $0x38] sm:$0xff]
  %v208 = vld [vmem:[%s3 + $0x40] sm:$0xff]
  %v209 = vld [vmem:[%s3 + $0x48] sm:$0xff]
  %v210 = vld [vmem:[%s3 + $0x50] sm:$0xff]
  %v211 = vld [vmem:[%s3 + $0x58] sm:$0xff]
  %v212 = vld [vmem:[%s3 + $0x60] sm:$0xff]
  %v213 = vld [vmem:[%s3 + $0x68] sm:$0xff]
  %v214 = vld [vmem:[%s3 + $0x70] sm:$0xff]
  %v215 = vld [vmem:[%s3 + $0x78] sm:$0xff]
  %v216 = vld [vmem:[%s3 + $0x80] sm:$0x1]
  %v217 = vlaneseq
  %v218 = vshrl.u32 %v217, 7
  %v219 = vsub.s32 0, %v218
  %v220 = vrot.slane %v216, %v219
  %221 = vmatprep.subr.mxu0 0.0
  %222 = vmatpush1.msra.mxu0 %v200
  %223 = vmatprep.subr.mxu0 0.0
  %224 = vmatpush1.msra.mxu0 %v201
  %225 = vmatprep.subr.mxu0 0.0
  %226 = vmatpush1.msra.mxu0 %v202
  %227 = vmatprep.subr.mxu0 0.0
  %228 = vmatpush1.msra.mxu0 %v203
  %229 = vmatprep.subr.mxu0 0.0
  %230 = vmatpush1.msra.mxu0 %v204
  %231 = vmatprep.subr.mxu0 0.0
  %232 = vmatpush1.msra.mxu0 %v205
  %233 = vmatprep.subr.mxu0 0.0
  %234 = vmatpush1.msra.mxu0 %v206
  %235 = vmatprep.subr.mxu0 0.0
  %236 = vmatpush1.msra.mxu0 %v207
  %237 = vmatprep.subr.mxu0 0.0
  %238 = vmatpush1.msra.mxu0 %v208
  %239 = vmatprep.subr.mxu0 0.0
  %240 = vmatpush1.msra.mxu0 %v209
  %241 = vmatprep.subr.mxu0 0.0
  %242 = vmatpush1.msra.mxu0 %v210
  %243 = vmatprep.subr.mxu0 0.0
  %244 = vmatpush1.msra.mxu0 %v211
  %245 = vmatprep.subr.mxu0 0.0
  %246 = vmatpush1.msra.mxu0 %v212
  %247 = vmatprep.subr.mxu0 0.0
  %248 = vmatpush1.msra.mxu0 %v213
  %249 = vmatprep.subr.mxu0 0.0
  %250 = vmatpush1.msra.mxu0 %v214
  %251 = vmatprep.subr.mxu0 0.0
  %252 = vmatpush1.msra.mxu0 %v215
  %253 = vmatprep.subr.mxu0 0.0
  %254 = vmatpush1.msra.mxu0 0.0
  %255 = vmatprep.subr.mxu0 0.0
  %256 = vmatpush1.msra.mxu0 0.0
  %257 = vmatprep.subr.mxu0 0.0
  %258 = vmatpush1.msra.mxu0 0.0
  %259 = vmatprep.subr.mxu0 0.0
  %260 = vmatpush1.msra.mxu0 0.0
  %261 = vmatprep.subr.mxu0 0.0
  %262 = vmatpush1.msra.mxu0 0.0
  %263 = vmatprep.subr.mxu0 0.0
  %264 = vmatpush1.msra.mxu0 0.0
  %265 = vmatprep.subr.mxu0 0.0
  %266 = vmatpush1.msra.mxu0 0.0
  %267 = vmatprep.subr.mxu0 0.0
  %268 = vmatpush1.msra.mxu0 0.0
  %269 = vmatprep.subr.mxu0 0.0
  %270 = vmatpush1.msra.mxu0 0.0
  %271 = vmatprep.subr.mxu0 0.0
  %272 = vmatpush1.msra.mxu0 0.0
  %273 = vmatprep.subr.mxu0 0.0
  %274 = vmatpush1.msra.mxu0 0.0
  %275 = vmatprep.subr.mxu0 0.0
  %276 = vmatpush1.msra.mxu0 0.0
  %277 = vmatprep.subr.mxu0 0.0
  %278 = vmatpush1.msra.mxu0 0.0
  %279 = vmatprep.subr.mxu0 0.0
  %280 = vmatpush1.msra.mxu0 0.0
  %281 = vmatprep.subr.mxu0 0.0
  %282 = vmatpush1.msra.mxu0 0.0
  %283 = vmatprep.subr.mxu0 0.0
  %284 = vmatpush1.msra.mxu0 0.0
  %285 = vmatprep.mubr.f32.mxu0 0.0
  %286 = vmatmul.mubr.f32.gmra.mrb[0].mxu0 %v199
  %v287 = vpop.f32.mrb[0].mxu0
  %v288 = vadd.f32 %v220, %v287
  %v289 = vpop.f32.mrb[0].mxu0
  %290 = vdwg.mxu0
  %vm291 = vcmask 15360
  %292 = vst.msk [vmem:[%s5] sm:$0xff] %vm291, %v288
  // Predicated region
  $region22: #{critic_forward.1} parent=0 // pred_check
    _
  $region23: #{critic_forward.1} parent=0 // pred_check_branch
    %294 = sbr.rel (0) target = $region25
  $region24: #{critic_forward.1} parent=0 // pred_region
    _
  $region25: #{critic_forward.1} parent=0 // pred_fallthru
    _
  // Predicated region
  $region26: #{critic_forward.1} parent=0 // pred_check
    _
  $region27: #{critic_forward.1} parent=0 // pred_check_branch
    %296 = sbr.rel (0) target = $region29
  $region28: #{critic_forward.1} parent=0 // pred_region
    _
  $region29: #{critic_forward.1} parent=0 // pred_fallthru
    _

</llo_original>
